<compile_context>
chip_gen: v5e
topology: v5e:2x2
jax: 0.10.0
libtpu: 0.0.40
codegen_flags: <defaults>
</compile_context>

<pallas_src>
import math
import jax
import jax.numpy as jnp
from jax.experimental import pallas as pl
from jax.experimental.pallas import tpu as pltpu  # noqa: F401

# --------------------------------------------------------------------------
# model dimensions (small, consistent with the module's forward)
# --------------------------------------------------------------------------
B = 2           # batch
S = 8           # sequence length
D = 32          # d_model
H = 4           # num_heads
HD = D // H     # head dim
FF = 64         # dim_feedforward
N = B * S       # total tokens processed per call
EPS = 1e-5


def midi_block_kernel(
    x_ref,       # (N, D)        tokens (batch folded into rows)
    wq_ref,      # (D, D)        W_q^T, pre-scaled by 1/sqrt(HD)
    wk_ref,      # (D, D)        W_k^T
    wv_ref,      # (D, D)        W_v^T
    wo_ref,      # (D, D)        out_proj.weight^T
    w1_ref,      # (D, FF)       linear1.weight^T
    w2_ref,      # (FF, D)       linear2.weight^T
    vec_ref,     # (10, FF)      packed biases + LayerNorm gamma/beta
    amask_ref,   # (N, H*N)      additive attention mask (causal + batch-block, tiled per head)
    hmask_ref,   # (H*N, D)      0/1 head-selector mask for block-stacked K/V
    bsum_ref,    # (H*N, H*N)    block-diagonal ones (per-head softmax denominators)
    out_ref,     # (N, D)
):
    x = x_ref[...]                                   # (N, D)

    vp = vec_ref[...]                                # (10, FF)
    b_q = vp[0:1, :D]
    b_k = vp[1:2, :D]
    b_v = vp[2:3, :D]
    b_o = vp[3:4, :D]
    b_1 = vp[4:5, :]                                 # (1, FF)
    b_2 = vp[5:6, :D]
    g_1 = vp[6:7, :D]
    be_1 = vp[7:8, :D]
    g_2 = vp[8:9, :D]
    be_2 = vp[9:10, :D]

    # ---------------- multi-head self-attention ----------------
    q = jnp.dot(x, wq_ref[...], preferred_element_type=jnp.float32) + b_q   # (N, D), pre-scaled
    k = jnp.dot(x, wk_ref[...], preferred_element_type=jnp.float32) + b_k
    v = jnp.dot(x, wv_ref[...], preferred_element_type=jnp.float32) + b_v

    # Block-stack K / V along rows (sublanes): row r = h*N + n holds token n
    # with only head h's feature block kept.  No transposes / lane shuffles.
    hmask = hmask_ref[...]                           # (H*N, D)
    k_rep = jnp.concatenate([k] * H, axis=0) * hmask  # (H*N, D)
    v_rep = jnp.concatenate([v] * H, axis=0) * hmask  # (H*N, D)

    # scores[i, h*N+j] = q_h[i] . k_h[j]   -- single MXU push, no k transpose
    scores = jax.lax.dot_general(
        q, k_rep,
        dimension_numbers=(((1,), (1,)), ((), ())),
        preferred_element_type=jnp.float32,
    ) + amask_ref[...]                               # (N, H*N)

    # Per-head softmax: global row-max for stability (same math, safe for
    # realistic score ranges), block sums via one matmul with ones blocks,
    # divide on the EUP via approximate reciprocal.
    m = jnp.max(scores, axis=-1, keepdims=True)      # (N, 1)
    e = jnp.exp(scores - m)                          # (N, H*N)
    denom = jnp.dot(e, bsum_ref[...], preferred_element_type=jnp.float32)   # (N, H*N)
    p = e * pl.reciprocal(denom, approx=True)

    ctx = jnp.dot(p, v_rep, preferred_element_type=jnp.float32)             # (N, D)
    attn = jnp.dot(ctx, wo_ref[...], preferred_element_type=jnp.float32) + b_o

    # residual + LayerNorm 1
    x1 = attn + x
    mu1 = jnp.mean(x1, axis=-1, keepdims=True)
    var1 = jnp.mean((x1 - mu1) * (x1 - mu1), axis=-1, keepdims=True)
    x1n = (x1 - mu1) * jax.lax.rsqrt(var1 + EPS) * g_1 + be_1

    # ---------------- feed-forward ----------------
    h1 = jnp.dot(x1n, w1_ref[...], preferred_element_type=jnp.float32) + b_1
    h1 = jnp.maximum(h1, 0.0)                        # ReLU
    h2 = jnp.dot(h1, w2_ref[...], preferred_element_type=jnp.float32) + b_2

    # residual + LayerNorm 2  (dropout = identity in inference)
    x2 = h2 + x1n
    mu2 = jnp.mean(x2, axis=-1, keepdims=True)
    var2 = jnp.mean((x2 - mu2) * (x2 - mu2), axis=-1, keepdims=True)
    out_ref[...] = ((x2 - mu2) * jax.lax.rsqrt(var2 + EPS) * g_2 + be_2).astype(out_ref.dtype)


# --------------------------------------------------------------------------
# host-side operand preparation (layout plumbing only — zero kernel cost)
# --------------------------------------------------------------------------
def _prepare_operands(x, tgt_mask, params):
    (in_w, in_b, ow, ob, w1, b1, w2, b2, g1, be1, g2, be2) = params
    scale = 1.0 / math.sqrt(HD)

    # pre-transposed projection weights; 1/sqrt(HD) folded into W_q / b_q
    wq_t = in_w[0 * D:1 * D, :].T * scale            # (D, D)
    wk_t = in_w[1 * D:2 * D, :].T                    # (D, D)
    wv_t = in_w[2 * D:3 * D, :].T                    # (D, D)
    wo_t = ow.T                                      # (D, D)
    w1_t = w1.T                                      # (D, FF)
    w2_t = w2.T                                      # (FF, D)

    # pack all bias / LayerNorm vectors into one (10, FF) operand
    def row(v):
        v = v.reshape(-1)
        return jnp.pad(v, (0, FF - v.shape[0]))

    in_b_flat = in_b.reshape(-1)
    vecs = jnp.stack([
        row(in_b_flat[0 * D:1 * D] * scale),         # 0: q bias (pre-scaled)
        row(in_b_flat[1 * D:2 * D]),                 # 1: k bias
        row(in_b_flat[2 * D:3 * D]),                 # 2: v bias
        row(ob),                                     # 3: out_proj bias
        row(b1),                                     # 4: linear1 bias (full FF)
        row(b2),                                     # 5: linear2 bias
        row(g1), row(be1),                           # 6,7: norm1 gamma / beta
        row(g2), row(be2),                           # 8,9: norm2 gamma / beta
    ])                                               # (10, FF)

    # additive attention mask: tgt_mask within each batch block, -1e9 across
    # batches, replicated once per head along the (head-major) key axis
    neg = jnp.float32(-1e9)
    bidx = jnp.arange(N) // S
    same_batch = bidx[:, None] == bidx[None, :]
    base = jnp.where(same_batch, jnp.tile(tgt_mask, (B, B)), neg)   # (N, N)
    amask = jnp.tile(base, (1, H)).astype(jnp.float32)              # (N, H*N)

    # 0/1 head-selector mask for block-stacked K / V copies
    head_of_row = jnp.arange(H * N) // N
    head_of_col = jnp.arange(D) // HD
    hmask = (head_of_row[:, None] == head_of_col[None, :]).astype(jnp.float32)   # (H*N, D)

    # block-diagonal ones -> per-head softmax denominators with one matmul
    blk = jnp.arange(H * N) // N
    bsum = (blk[:, None] == blk[None, :]).astype(jnp.float32)       # (H*N, H*N)

    x2d = x.reshape(N, D)
    return (x2d, wq_t, wk_t, wv_t, wo_t, w1_t, w2_t, vecs, amask, hmask, bsum)


@jax.jit
def midi_block(x, tgt_mask, params):
    """x: (B, S, D) float32; tgt_mask: (S, S) additive float mask."""
    operands = _prepare_operands(x, tgt_mask, params)
    out2d = pl.pallas_call(
        midi_block_kernel,
        out_shape=jax.ShapeDtypeStruct((N, D), jnp.float32),
    )(*operands)
    return out2d.reshape(B, S, D)


# --------------------------------------------------------------------------
# deterministic parameter init (xavier-uniform for weights, zeros for biases,
# ones/zeros for LayerNorm -- matches MidiBlock._init_weights semantics)
# --------------------------------------------------------------------------
def xavier(key, shape):
    fan_out, fan_in = shape
    bound = math.sqrt(6.0 / (fan_in + fan_out))
    return jax.random.uniform(key, shape, jnp.float32, -bound, bound)


def make_params(key):
    ks = jax.random.split(key, 4)
    in_w = xavier(ks[0], (3 * D, D))
    in_b = jnp.zeros((1, 3 * D), jnp.float32)
    ow = xavier(ks[1], (D, D))
    ob = jnp.zeros((1, D), jnp.float32)
    w1 = xavier(ks[2], (FF, D))
    b1 = jnp.zeros((1, FF), jnp.float32)
    w2 = xavier(ks[3], (D, FF))
    b2 = jnp.zeros((1, D), jnp.float32)
    g1 = jnp.ones((1, D), jnp.float32)
    be1 = jnp.zeros((1, D), jnp.float32)
    g2 = jnp.ones((1, D), jnp.float32)
    be2 = jnp.zeros((1, D), jnp.float32)
    return (in_w, in_b, ow, ob, w1, b1, w2, b2, g1, be1, g2, be2)


if __name__ == "__main__":
    key = jax.random.PRNGKey(0)
    kx, kp = jax.random.split(key)

    x = jax.random.normal(kx, (B, S, D), jnp.float32)
    # causal additive mask: 0 on/below diagonal, -1e9 above (same role as tgt_mask)
    causal = jnp.triu(jnp.full((S, S), -1e9, jnp.float32), k=1)
    params = make_params(kp)

    out = midi_block(x, causal, params)
    jax.block_until_ready(out)
    assert out.shape == (B, S, D)
    assert bool(jnp.all(jnp.isfinite(out)))
    print("KERNEL_OK")
</pallas_src>

<mosaic_0001>
module attributes {stable_mosaic.version = 11 : i64} {
  func.func @midi_block_kernel(%arg0: memref<16x32xf32, #tpu.memory_space<vmem>>, %arg1: memref<32x32xf32, #tpu.memory_space<vmem>>, %arg2: memref<32x32xf32, #tpu.memory_space<vmem>>, %arg3: memref<32x32xf32, #tpu.memory_space<vmem>>, %arg4: memref<32x32xf32, #tpu.memory_space<vmem>>, %arg5: memref<32x64xf32, #tpu.memory_space<vmem>>, %arg6: memref<64x32xf32, #tpu.memory_space<vmem>>, %arg7: memref<10x64xf32, #tpu.memory_space<vmem>>, %arg8: memref<16x64xf32, #tpu.memory_space<vmem>>, %arg9: memref<64x32xf32, #tpu.memory_space<vmem>>, %arg10: memref<64x64xf32, #tpu.memory_space<vmem>>, %arg11: memref<16x32xf32, #tpu.memory_space<vmem>>) attributes {dimension_semantics = [], scalar_prefetch = 0 : i64, scratch_operands = 0 : i64, tpu.core_type = #tpu.core_type<tc>} {
    %c0 = arith.constant 0 : index
    %c0_0 = arith.constant 0 : index
    %0 = vector.load %arg0[%c0, %c0_0] : memref<16x32xf32, #tpu.memory_space<vmem>>, vector<16x32xf32>
    %c0_1 = arith.constant 0 : index
    %c0_2 = arith.constant 0 : index
    %1 = vector.load %arg7[%c0_1, %c0_2] : memref<10x64xf32, #tpu.memory_space<vmem>>, vector<10x64xf32>
    %2 = vector.extract_strided_slice %1 {offsets = [0, 0], sizes = [1, 32], strides = [1, 1]} : vector<10x64xf32> to vector<1x32xf32>
    %3 = vector.extract_strided_slice %1 {offsets = [1, 0], sizes = [1, 32], strides = [1, 1]} : vector<10x64xf32> to vector<1x32xf32>
    %4 = vector.extract_strided_slice %1 {offsets = [2, 0], sizes = [1, 32], strides = [1, 1]} : vector<10x64xf32> to vector<1x32xf32>
    %5 = vector.extract_strided_slice %1 {offsets = [3, 0], sizes = [1, 32], strides = [1, 1]} : vector<10x64xf32> to vector<1x32xf32>
    %6 = vector.extract_strided_slice %1 {offsets = [4, 0], sizes = [1, 64], strides = [1, 1]} : vector<10x64xf32> to vector<1x64xf32>
    %7 = vector.extract_strided_slice %1 {offsets = [5, 0], sizes = [1, 32], strides = [1, 1]} : vector<10x64xf32> to vector<1x32xf32>
    %8 = vector.extract_strided_slice %1 {offsets = [6, 0], sizes = [1, 32], strides = [1, 1]} : vector<10x64xf32> to vector<1x32xf32>
    %9 = vector.extract_strided_slice %1 {offsets = [7, 0], sizes = [1, 32], strides = [1, 1]} : vector<10x64xf32> to vector<1x32xf32>
    %10 = vector.extract_strided_slice %1 {offsets = [8, 0], sizes = [1, 32], strides = [1, 1]} : vector<10x64xf32> to vector<1x32xf32>
    %11 = vector.extract_strided_slice %1 {offsets = [9, 0], sizes = [1, 32], strides = [1, 1]} : vector<10x64xf32> to vector<1x32xf32>
    %c0_3 = arith.constant 0 : index
    %c0_4 = arith.constant 0 : index
    %12 = vector.load %arg1[%c0_3, %c0_4] : memref<32x32xf32, #tpu.memory_space<vmem>>, vector<32x32xf32>
    %cst = arith.constant dense<0.000000e+00> : vector<16x32xf32>
    %13 = tpu.matmul %0, %12, %cst {dimension_numbers = #tpu.dot_dimension_numbers<[1], [0], [0], [1], [0, 0, 1, 1], [], []>} : vector<16x32xf32>, vector<32x32xf32>, vector<16x32xf32> -> vector<16x32xf32>
    %14 = vector.broadcast %2 : vector<1x32xf32> to vector<16x32xf32>
    %15 = arith.addf %13, %14 : vector<16x32xf32>
    %c0_5 = arith.constant 0 : index
    %c0_6 = arith.constant 0 : index
    %16 = vector.load %arg2[%c0_5, %c0_6] : memref<32x32xf32, #tpu.memory_space<vmem>>, vector<32x32xf32>
    %cst_7 = arith.constant dense<0.000000e+00> : vector<16x32xf32>
    %17 = tpu.matmul %0, %16, %cst_7 {dimension_numbers = #tpu.dot_dimension_numbers<[1], [0], [0], [1], [0, 0, 1, 1], [], []>} : vector<16x32xf32>, vector<32x32xf32>, vector<16x32xf32> -> vector<16x32xf32>
    %18 = vector.broadcast %3 : vector<1x32xf32> to vector<16x32xf32>
    %19 = arith.addf %17, %18 : vector<16x32xf32>
    %c0_8 = arith.constant 0 : index
    %c0_9 = arith.constant 0 : index
    %20 = vector.load %arg3[%c0_8, %c0_9] : memref<32x32xf32, #tpu.memory_space<vmem>>, vector<32x32xf32>
    %cst_10 = arith.constant dense<0.000000e+00> : vector<16x32xf32>
    %21 = tpu.matmul %0, %20, %cst_10 {dimension_numbers = #tpu.dot_dimension_numbers<[1], [0], [0], [1], [0, 0, 1, 1], [], []>} : vector<16x32xf32>, vector<32x32xf32>, vector<16x32xf32> -> vector<16x32xf32>
    %22 = vector.broadcast %4 : vector<1x32xf32> to vector<16x32xf32>
    %23 = arith.addf %21, %22 : vector<16x32xf32>
    %c0_11 = arith.constant 0 : index
    %c0_12 = arith.constant 0 : index
    %24 = vector.load %arg9[%c0_11, %c0_12] : memref<64x32xf32, #tpu.memory_space<vmem>>, vector<64x32xf32>
    %25 = tpu.concatenate %19, %19, %19, %19 in 0 : vector<16x32xf32>, vector<16x32xf32>, vector<16x32xf32>, vector<16x32xf32> -> vector<64x32xf32>
    %26 = arith.mulf %25, %24 : vector<64x32xf32>
    %27 = tpu.concatenate %23, %23, %23, %23 in 0 : vector<16x32xf32>, vector<16x32xf32>, vector<16x32xf32>, vector<16x32xf32> -> vector<64x32xf32>
    %28 = arith.mulf %27, %24 : vector<64x32xf32>
    %cst_13 = arith.constant dense<0.000000e+00> : vector<16x64xf32>
    %29 = tpu.matmul %15, %26, %cst_13 {dimension_numbers = #tpu.dot_dimension_numbers<[1], [1], [0], [0], [0, 0, 1, 0], [], []>} : vector<16x32xf32>, vector<64x32xf32>, vector<16x64xf32> -> vector<16x64xf32>
    %c0_14 = arith.constant 0 : index
    %c0_15 = arith.constant 0 : index
    %30 = vector.load %arg8[%c0_14, %c0_15] : memref<16x64xf32, #tpu.memory_space<vmem>>, vector<16x64xf32>
    %31 = arith.addf %29, %30 : vector<16x64xf32>
    %cst_16 = arith.constant dense<0xFF800000> : vector<16xf32>
    %32 = vector.multi_reduction <maximumf>, %31, %cst_16 [1] : vector<16x64xf32> to vector<16xf32>
    %33 = vector.shape_cast %32 : vector<16xf32> to vector<16x1xf32>
    %34 = vector.broadcast %33 : vector<16x1xf32> to vector<16x64xf32>
    %35 = arith.subf %31, %34 : vector<16x64xf32>
    %36 = math.exp %35 : vector<16x64xf32>
    %c0_17 = arith.constant 0 : index
    %c0_18 = arith.constant 0 : index
    %37 = vector.load %arg10[%c0_17, %c0_18] : memref<64x64xf32, #tpu.memory_space<vmem>>, vector<64x64xf32>
    %cst_19 = arith.constant dense<0.000000e+00> : vector<16x64xf32>
    %38 = tpu.matmul %36, %37, %cst_19 {dimension_numbers = #tpu.dot_dimension_numbers<[1], [0], [0], [1], [0, 0, 1, 1], [], []>} : vector<16x64xf32>, vector<64x64xf32>, vector<16x64xf32> -> vector<16x64xf32>
    %39 = tpu.reciprocal %38 {approx = true} : vector<16x64xf32> -> vector<16x64xf32>
    %40 = arith.mulf %36, %39 : vector<16x64xf32>
    %cst_20 = arith.constant dense<0.000000e+00> : vector<16x32xf32>
    %41 = tpu.matmul %40, %28, %cst_20 {dimension_numbers = #tpu.dot_dimension_numbers<[1], [0], [0], [1], [0, 0, 1, 1], [], []>} : vector<16x64xf32>, vector<64x32xf32>, vector<16x32xf32> -> vector<16x32xf32>
    %c0_21 = arith.constant 0 : index
    %c0_22 = arith.constant 0 : index
    %42 = vector.load %arg4[%c0_21, %c0_22] : memref<32x32xf32, #tpu.memory_space<vmem>>, vector<32x32xf32>
    %cst_23 = arith.constant dense<0.000000e+00> : vector<16x32xf32>
    %43 = tpu.matmul %41, %42, %cst_23 {dimension_numbers = #tpu.dot_dimension_numbers<[1], [0], [0], [1], [0, 0, 1, 1], [], []>} : vector<16x32xf32>, vector<32x32xf32>, vector<16x32xf32> -> vector<16x32xf32>
    %44 = vector.broadcast %5 : vector<1x32xf32> to vector<16x32xf32>
    %45 = arith.addf %43, %44 : vector<16x32xf32>
    %46 = arith.addf %45, %0 : vector<16x32xf32>
    %cst_24 = arith.constant dense<0.000000e+00> : vector<16xf32>
    %47 = vector.multi_reduction <add>, %46, %cst_24 [1] : vector<16x32xf32> to vector<16xf32>
    %48 = vector.shape_cast %47 : vector<16xf32> to vector<16x1xf32>
    %cst_25 = arith.constant 3.200000e+01 : f32
    %49 = vector.broadcast %cst_25 : f32 to vector<16x1xf32>
    %50 = arith.divf %48, %49 : vector<16x1xf32>
    %51 = vector.broadcast %50 : vector<16x1xf32> to vector<16x32xf32>
    %52 = arith.subf %46, %51 : vector<16x32xf32>
    %53 = vector.broadcast %50 : vector<16x1xf32> to vector<16x32xf32>
    %54 = arith.subf %46, %53 : vector<16x32xf32>
    %55 = arith.mulf %52, %54 : vector<16x32xf32>
    %cst_26 = arith.constant dense<0.000000e+00> : vector<16xf32>
    %56 = vector.multi_reduction <add>, %55, %cst_26 [1] : vector<16x32xf32> to vector<16xf32>
    %57 = vector.shape_cast %56 : vector<16xf32> to vector<16x1xf32>
    %cst_27 = arith.constant 3.200000e+01 : f32
    %58 = vector.broadcast %cst_27 : f32 to vector<16x1xf32>
    %59 = arith.divf %57, %58 : vector<16x1xf32>
    %60 = vector.broadcast %50 : vector<16x1xf32> to vector<16x32xf32>
    %61 = arith.subf %46, %60 : vector<16x32xf32>
    %cst_28 = arith.constant 9.99999974E-6 : f32
    %62 = vector.broadcast %cst_28 : f32 to vector<16x1xf32>
    %63 = arith.addf %59, %62 : vector<16x1xf32>
    %64 = math.rsqrt %63 : vector<16x1xf32>
    %65 = vector.broadcast %64 : vector<16x1xf32> to vector<16x32xf32>
    %66 = arith.mulf %61, %65 : vector<16x32xf32>
    %67 = vector.broadcast %8 : vector<1x32xf32> to vector<16x32xf32>
    %68 = arith.mulf %66, %67 : vector<16x32xf32>
    %69 = vector.broadcast %9 : vector<1x32xf32> to vector<16x32xf32>
    %70 = arith.addf %68, %69 : vector<16x32xf32>
    %c0_29 = arith.constant 0 : index
    %c0_30 = arith.constant 0 : index
    %71 = vector.load %arg5[%c0_29, %c0_30] : memref<32x64xf32, #tpu.memory_space<vmem>>, vector<32x64xf32>
    %cst_31 = arith.constant dense<0.000000e+00> : vector<16x64xf32>
    %72 = tpu.matmul %70, %71, %cst_31 {dimension_numbers = #tpu.dot_dimension_numbers<[1], [0], [0], [1], [0, 0, 1, 1], [], []>} : vector<16x32xf32>, vector<32x64xf32>, vector<16x64xf32> -> vector<16x64xf32>
    %73 = vector.broadcast %6 : vector<1x64xf32> to vector<16x64xf32>
    %74 = arith.addf %72, %73 : vector<16x64xf32>
    %cst_32 = arith.constant 0.000000e+00 : f32
    %75 = vector.broadcast %cst_32 : f32 to vector<16x64xf32>
    %76 = arith.maximumf %74, %75 : vector<16x64xf32>
    %c0_33 = arith.constant 0 : index
    %c0_34 = arith.constant 0 : index
    %77 = vector.load %arg6[%c0_33, %c0_34] : memref<64x32xf32, #tpu.memory_space<vmem>>, vector<64x32xf32>
    %cst_35 = arith.constant dense<0.000000e+00> : vector<16x32xf32>
    %78 = tpu.matmul %76, %77, %cst_35 {dimension_numbers = #tpu.dot_dimension_numbers<[1], [0], [0], [1], [0, 0, 1, 1], [], []>} : vector<16x64xf32>, vector<64x32xf32>, vector<16x32xf32> -> vector<16x32xf32>
    %79 = vector.broadcast %7 : vector<1x32xf32> to vector<16x32xf32>
    %80 = arith.addf %78, %79 : vector<16x32xf32>
    %81 = arith.addf %80, %70 : vector<16x32xf32>
    %cst_36 = arith.constant dense<0.000000e+00> : vector<16xf32>
    %82 = vector.multi_reduction <add>, %81, %cst_36 [1] : vector<16x32xf32> to vector<16xf32>
    %83 = vector.shape_cast %82 : vector<16xf32> to vector<16x1xf32>
    %cst_37 = arith.constant 3.200000e+01 : f32
    %84 = vector.broadcast %cst_37 : f32 to vector<16x1xf32>
    %85 = arith.divf %83, %84 : vector<16x1xf32>
    %86 = vector.broadcast %85 : vector<16x1xf32> to vector<16x32xf32>
    %87 = arith.subf %81, %86 : vector<16x32xf32>
    %88 = vector.broadcast %85 : vector<16x1xf32> to vector<16x32xf32>
    %89 = arith.subf %81, %88 : vector<16x32xf32>
    %90 = arith.mulf %87, %89 : vector<16x32xf32>
    %cst_38 = arith.constant dense<0.000000e+00> : vector<16xf32>
    %91 = vector.multi_reduction <add>, %90, %cst_38 [1] : vector<16x32xf32> to vector<16xf32>
    %92 = vector.shape_cast %91 : vector<16xf32> to vector<16x1xf32>
    %cst_39 = arith.constant 3.200000e+01 : f32
    %93 = vector.broadcast %cst_39 : f32 to vector<16x1xf32>
    %94 = arith.divf %92, %93 : vector<16x1xf32>
    %95 = vector.broadcast %85 : vector<16x1xf32> to vector<16x32xf32>
    %96 = arith.subf %81, %95 : vector<16x32xf32>
    %cst_40 = arith.constant 9.99999974E-6 : f32
    %97 = vector.broadcast %cst_40 : f32 to vector<16x1xf32>
    %98 = arith.addf %94, %97 : vector<16x1xf32>
    %99 = math.rsqrt %98 : vector<16x1xf32>
    %100 = vector.broadcast %99 : vector<16x1xf32> to vector<16x32xf32>
    %101 = arith.mulf %96, %100 : vector<16x32xf32>
    %102 = vector.broadcast %10 : vector<1x32xf32> to vector<16x32xf32>
    %103 = arith.mulf %101, %102 : vector<16x32xf32>
    %104 = vector.broadcast %11 : vector<1x32xf32> to vector<16x32xf32>
    %105 = arith.addf %103, %104 : vector<16x32xf32>
    %c0_41 = arith.constant 0 : index
    %c0_42 = arith.constant 0 : index
    %106 = vector.load %arg11[%c0_41, %c0_42] : memref<16x32xf32, #tpu.memory_space<vmem>>, vector<16x32xf32>
    tpu.vector_store %arg11[%c0_41, %c0_42], %105 {strides = array<i32>} : memref<16x32xf32, #tpu.memory_space<vmem>>, vector<16x32xf32>,
    return
  }
}

</mosaic_0001>

<llo_original>
// kernel: tile.13
$region0: #{tile.13}
  #allocation0 [shape = 's32[1]{0}', space=sflag, size = 0x4, scoped, tag = 'scoped memory for tile.13']
  %s0 = inlined_call_operand.vmem [shape: f32[8,8], index: 0, kind: input, shape index: {}]
  %s1 = inlined_call_operand.vmem [shape: f32[2,8,2,8], index: 1, kind: output, shape index: {}]
  // Predicated region
  $region2: #{tile.13} parent=0 // pred_check
    _
  $region3: #{tile.13} parent=0 // pred_check_branch
    %3 = sbr.rel (0) target = $region5
  $region4: #{tile.13} parent=0 // pred_region
    _
  $region5: #{tile.13} parent=0 // pred_fallthru
    _
  %v4 = vld [vmem:[%s0] ss:$0 sm:$0xff]
  %5 = vst [vmem:[%s1] sm:$0x3] %v4
  %s6 = scalar_lea.vmem %s1, 16
  %7 = vst [vmem:[%s6] sm:$0x3] %v4
  %s8 = scalar_lea.vmem %s0, 1
  %v9 = vld [vmem:[%s8] ss:$0 sm:$0xff]
  %s10 = scalar_lea.vmem %s1, 2
  %11 = vst [vmem:[%s10] sm:$0x3] %v9
  %s12 = scalar_lea.vmem %s1, 18
  %13 = vst [vmem:[%s12] sm:$0x3] %v9
  %s14 = scalar_lea.vmem %s0, 2
  %v15 = vld [vmem:[%s14] ss:$0 sm:$0xff]
  %s16 = scalar_lea.vmem %s1, 4
  %17 = vst [vmem:[%s16] sm:$0x3] %v15
  %s18 = scalar_lea.vmem %s1, 20
  %19 = vst [vmem:[%s18] sm:$0x3] %v15
  %s20 = scalar_lea.vmem %s0, 3
  %v21 = vld [vmem:[%s20] ss:$0 sm:$0xff]
  %s22 = scalar_lea.vmem %s1, 6
  %23 = vst [vmem:[%s22] sm:$0x3] %v21
  %s24 = scalar_lea.vmem %s1, 22
  %25 = vst [vmem:[%s24] sm:$0x3] %v21
  %s26 = scalar_lea.vmem %s0, 4
  %v27 = vld [vmem:[%s26] ss:$0 sm:$0xff]
  %s28 = scalar_lea.vmem %s1, 8
  %29 = vst [vmem:[%s28] sm:$0x3] %v27
  %s30 = scalar_lea.vmem %s1, 24
  %31 = vst [vmem:[%s30] sm:$0x3] %v27
  %s32 = scalar_lea.vmem %s0, 5
  %v33 = vld [vmem:[%s32] ss:$0 sm:$0xff]
  %s34 = scalar_lea.vmem %s1, 10
  %35 = vst [vmem:[%s34] sm:$0x3] %v33
  %s36 = scalar_lea.vmem %s1, 26
  %37 = vst [vmem:[%s36] sm:$0x3] %v33
  %s38 = scalar_lea.vmem %s0, 6
  %v39 = vld [vmem:[%s38] ss:$0 sm:$0xff]
  %s40 = scalar_lea.vmem %s1, 12
  %41 = vst [vmem:[%s40] sm:$0x3] %v39
  %s42 = scalar_lea.vmem %s1, 28
  %43 = vst [vmem:[%s42] sm:$0x3] %v39
  %s44 = scalar_lea.vmem %s0, 7
  %v45 = vld [vmem:[%s44] ss:$0 sm:$0xff]
  %s46 = scalar_lea.vmem %s1, 14
  %47 = vst [vmem:[%s46] sm:$0x3] %v45
  %s48 = scalar_lea.vmem %s1, 30
  %49 = vst [vmem:[%s48] sm:$0x3] %v45

// kernel: tile.19
$region0: #{tile.19}
  %s0 = inlined_call_operand.vmem [shape: f32[16,4,16], index: 0, kind: input, shape index: {}]
  %s1 = inlined_call_operand.vmem [shape: f32[16,64], index: 1, kind: output, shape index: {}]
  $region1: #{tile.19} parent=0
    #allocation0 [shape = 'u8[65536]{0}', space=vmem, size = 0x10000, scoped, tag = 'scoped mem for input reshape']
    %s3 = ssub.s32 16, 1
    %s4 = scalar_lea.vmem %s0, 60
    %v5 = vld [vmem:[%s4] sm:%s3]
    %s6 = scalar_lea.vmem [#allocation0], 120
    %7 = vst [vmem:[%s6] sm:%s3] %v5
    %s8 = scalar_lea.vmem %s0, 56
    %v9 = vld [vmem:[%s8] sm:%s3]
    %s10 = scalar_lea.vmem [#allocation0], 112
    %11 = vst [vmem:[%s10] sm:%s3] %v9
    %s12 = scalar_lea.vmem %s0, 52
    %v13 = vld [vmem:[%s12] sm:%s3]
    %s14 = scalar_lea.vmem [#allocation0], 104
    %15 = vst [vmem:[%s14] sm:%s3] %v13
    %s16 = scalar_lea.vmem %s0, 48
    %v17 = vld [vmem:[%s16] sm:%s3]
    %s18 = scalar_lea.vmem [#allocation0], 96
    %19 = vst [vmem:[%s18] sm:%s3] %v17
    %s20 = scalar_lea.vmem %s0, 44
    %v21 = vld [vmem:[%s20] sm:%s3]
    %s22 = scalar_lea.vmem [#allocation0], 88
    %23 = vst [vmem:[%s22] sm:%s3] %v21
    %s24 = scalar_lea.vmem %s0, 40
    %v25 = vld [vmem:[%s24] sm:%s3]
    %s26 = scalar_lea.vmem [#allocation0], 80
    %27 = vst [vmem:[%s26] sm:%s3] %v25
    %s28 = scalar_lea.vmem %s0, 36
    %v29 = vld [vmem:[%s28] sm:%s3]
    %s30 = scalar_lea.vmem [#allocation0], 72
    %31 = vst [vmem:[%s30] sm:%s3] %v29
    %s32 = scalar_lea.vmem %s0, 32
    %v33 = vld [vmem:[%s32] sm:%s3]
    %s34 = scalar_lea.vmem [#allocation0], 64
    %35 = vst [vmem:[%s34] sm:%s3] %v33
    %s36 = scalar_lea.vmem %s0, 28
    %v37 = vld [vmem:[%s36] sm:%s3]
    %s38 = scalar_lea.vmem [#allocation0], 56
    %39 = vst [vmem:[%s38] sm:%s3] %v37
    %s40 = scalar_lea.vmem %s0, 24
    %v41 = vld [vmem:[%s40] sm:%s3]
    %s42 = scalar_lea.vmem [#allocation0], 48
    %43 = vst [vmem:[%s42] sm:%s3] %v41
    %s44 = scalar_lea.vmem %s0, 20
    %v45 = vld [vmem:[%s44] sm:%s3]
    %s46 = scalar_lea.vmem [#allocation0], 40
    %47 = vst [vmem:[%s46] sm:%s3] %v45
    %s48 = scalar_lea.vmem %s0, 16
    %v49 = vld [vmem:[%s48] sm:%s3]
    %s50 = scalar_lea.vmem [#allocation0], 32
    %51 = vst [vmem:[%s50] sm:%s3] %v49
    %s52 = scalar_lea.vmem %s0, 12
    %v53 = vld [vmem:[%s52] sm:%s3]
    %s54 = scalar_lea.vmem [#allocation0], 24
    %55 = vst [vmem:[%s54] sm:%s3] %v53
    %s56 = scalar_lea.vmem %s0, 8
    %v57 = vld [vmem:[%s56] sm:%s3]
    %s58 = scalar_lea.vmem [#allocation0], 16
    %59 = vst [vmem:[%s58] sm:%s3] %v57
    %s60 = scalar_lea.vmem %s0, 4
    %v61 = vld [vmem:[%s60] sm:%s3]
    %s62 = scalar_lea.vmem [#allocation0], 8
    %63 = vst [vmem:[%s62] sm:%s3] %v61
    %v64 = vld [vmem:[%s0] sm:%s3]
    %65 = vst [vmem:[#allocation0] sm:%s3] %v64
    %v66 = vld [vmem:[#allocation0] ss:$8 sm:$0xf]
    %v67 = vld [vmem:[#allocation0] ss:$8 sm:$0xf0]
    %vm68 = vcmask 1047556
    %v69 = vsel %vm68, %v67, %v66
    %vm70 = vcmask 130048
    %71 = vst.msk [vmem:[%s1] sm:$0xff] %vm70, %v69
    %s72 = scalar_lea.vmem [#allocation0], 64
    %v73 = vld [vmem:[%s72] ss:$8 sm:$0xf]
    %s74 = scalar_lea.vmem [#allocation0], 64
    %v75 = vld [vmem:[%s74] ss:$8 sm:$0xf0]
    %vm76 = vcmask 1047556
    %v77 = vsel %vm76, %v75, %v73
    %vm78 = vcmask 130048
    %s79 = scalar_lea.vmem %s1, 8
    %80 = vst.msk [vmem:[%s79] sm:$0xff] %vm78, %v77
    %s81 = scalar_lea.vmem [#allocation0], 3
    %v82 = vld [vmem:[%s81] ss:$8 sm:$0xf]
    %s83 = scalar_lea.vmem [#allocation0], 3
    %v84 = vld [vmem:[%s83] ss:$8 sm:$0xf0]
    %vm85 = vcmask 1047556
    %v86 = vsel %vm85, %v84, %v82
    %87 = vrot.lane.b32.xlu0 %v86, 48
    %v88 = vpop.permute.xlu0 %87
    %vm89 = vcmask 523648
    %90 = vst.msk [vmem:[%s1] sm:$0xff] %vm89, %v88
    %s91 = scalar_lea.vmem [#allocation0], 67
    %v92 = vld [vmem:[%s91] ss:$8 sm:$0xf]
    %s93 = scalar_lea.vmem [#allocation0], 67
    %v94 = vld [vmem:[%s93] ss:$8 sm:$0xf0]
    %vm95 = vcmask 1047556
    %v96 = vsel %vm95, %v94, %v92
    %97 = vrot.lane.b32.xlu0 %v96, 48
    %v98 = vpop.permute.xlu0 %97
    %vm99 = vcmask 523648
    %s100 = scalar_lea.vmem %s1, 8
    %101 = vst.msk [vmem:[%s100] sm:$0xff] %vm99, %v98
    %s102 = scalar_lea.vmem [#allocation0], 2
    %v103 = vld [vmem:[%s102] ss:$8 sm:$0xf]
    %s104 = scalar_lea.vmem [#allocation0], 2
    %v105 = vld [vmem:[%s104] ss:$8 sm:$0xf0]
    %vm106 = vcmask 1047556
    %v107 = vsel %vm106, %v105, %v103
    %108 = vrot.lane.b32.xlu0 %v107, 32
    %v109 = vpop.permute.xlu0 %108
    %vm110 = vcmask 392448
    %111 = vst.msk [vmem:[%s1] sm:$0xff] %vm110, %v109
    %s112 = scalar_lea.vmem [#allocation0], 66
    %v113 = vld [vmem:[%s112] ss:$8 sm:$0xf]
    %s114 = scalar_lea.vmem [#allocation0], 66
    %v115 = vld [vmem:[%s114] ss:$8 sm:$0xf0]
    %vm116 = vcmask 1047556
    %v117 = vsel %vm116, %v115, %v113
    %118 = vrot.lane.b32.xlu0 %v117, 32
    %v119 = vpop.permute.xlu0 %118
    %vm120 = vcmask 392448
    %s121 = scalar_lea.vmem %s1, 8
    %122 = vst.msk [vmem:[%s121] sm:$0xff] %vm120, %v119
    %s123 = scalar_lea.vmem [#allocation0], 1
    %v124 = vld [vmem:[%s123] ss:$8 sm:$0xf]
    %s125 = scalar_lea.vmem [#allocation0], 1
    %v126 = vld [vmem:[%s125] ss:$8 sm:$0xf0]
    %vm127 = vcmask 1047556
    %v128 = vsel %vm127, %v126, %v124
    %129 = vrot.lane.b32.xlu0 %v128, 16
    %v130 = vpop.permute.xlu0 %129
    %vm131 = vcmask 261248
    %132 = vst.msk [vmem:[%s1] sm:$0xff] %vm131, %v130
    %s133 = scalar_lea.vmem [#allocation0], 65
    %v134 = vld [vmem:[%s133] ss:$8 sm:$0xf]
    %s135 = scalar_lea.vmem [#allocation0], 65
    %v136 = vld [vmem:[%s135] ss:$8 sm:$0xf0]
    %vm137 = vcmask 1047556
    %v138 = vsel %vm137, %v136, %v134
    %139 = vrot.lane.b32.xlu0 %v138, 16
    %v140 = vpop.permute.xlu0 %139
    %vm141 = vcmask 261248
    %s142 = scalar_lea.vmem %s1, 8
    %143 = vst.msk [vmem:[%s142] sm:$0xff] %vm141, %v140

// kernel: midi_block.1
$region0: #{midi_block.1}
  #allocation0 [shape = 'u32[]', space=smem, size = 0x4, offset = 0x4, fixed_abs, tag = 'smem constant byte address 0x4 - core index']
  #allocation1 [shape = 'u32[72,128]{1,0:T(1,128)}', space=vmem, size = 0x9000, scoped, tag = 'internal scratch']
  %s0 = inlined_call_operand.vmem [shape: f32[16,32], index: 0, kind: input, shape index: {}]
  %s1 = inlined_call_operand.vmem [shape: f32[32,32], index: 1, kind: input, shape index: {}]
  %s2 = inlined_call_operand.vmem [shape: f32[32,32], index: 2, kind: input, shape index: {}]
  %s3 = inlined_call_operand.vmem [shape: f32[32,32], index: 3, kind: input, shape index: {}]
  %s4 = inlined_call_operand.vmem [shape: f32[32,32], index: 4, kind: input, shape index: {}]
  %s5 = inlined_call_operand.vmem [shape: f32[32,64], index: 5, kind: input, shape index: {}]
  %s6 = inlined_call_operand.vmem [shape: f32[64,32], index: 6, kind: input, shape index: {}]
  %s7 = inlined_call_operand.vmem [shape: f32[10,64], index: 7, kind: input, shape index: {}]
  %s8 = inlined_call_operand.vmem [shape: f32[16,64], index: 8, kind: input, shape index: {}]
  %s9 = inlined_call_operand.vmem [shape: f32[64,32], index: 9, kind: input, shape index: {}]
  %s10 = inlined_call_operand.vmem [shape: f32[64,64], index: 10, kind: input, shape index: {}]
  %s11 = inlined_call_operand.hbm [shape: f32[16,32], index: 11, kind: output, shape index: {}]
  %s12 = sld [smem:[#allocation0]]
  $region54: #{midi_block.1} parent=0
    _
  %s14 = ssub.s32 1, %s12
  %s15 = scalar_select 0, %s14, %s12
  $region1: #{midi_block.1} parent=0
    #allocation2 [shape = 'u8[8192]{0}', space=vmem, size = 0x2000, scoped, tag = 'output window, operand 0, single buffered']
    #allocation3 [shape = 's32[1]{0}', space=sflag, size = 0x4, scoped, tag = 'scoped memory for midi_block.1']
    %16 = vsyncpa [#allocation3], 0
    // Predicated region
    $region2: #{midi_block.1} parent=1 // pred_check
      _
    $region3: #{midi_block.1} parent=1 // pred_check_branch
      %18 = sbr.rel (0) target = $region5
    $region4: #{midi_block.1} parent=1 // pred_region
      _
    $region5: #{midi_block.1} parent=1 // pred_fallthru
      _
    // Predicated region
    $region6: #{midi_block.1} parent=1 // pred_check
      _
    $region7: #{midi_block.1} parent=1 // pred_check_branch
      %20 = sbr.rel (0) target = $region9
    $region8: #{midi_block.1} parent=1 // pred_region
      _
    $region9: #{midi_block.1} parent=1 // pred_fallthru
      _
    // Predicated region
    $region10: #{midi_block.1} parent=1 // pred_check
      _
    $region11: #{midi_block.1} parent=1 // pred_check_branch
      %22 = sbr.rel (0) target = $region13
    $region12: #{midi_block.1} parent=1 // pred_region
      _
    $region13: #{midi_block.1} parent=1 // pred_fallthru
      _
    // Predicated region
    $region14: #{midi_block.1} parent=1 // pred_check
      _
    $region15: #{midi_block.1} parent=1 // pred_check_branch
      %24 = sbr.rel (0) target = $region17
    $region16: #{midi_block.1} parent=1 // pred_region
      _
    $region17: #{midi_block.1} parent=1 // pred_fallthru
      _
    // Predicated region
    $region18: #{midi_block.1} parent=1 // pred_check
      _
    $region19: #{midi_block.1} parent=1 // pred_check_branch
      %26 = sbr.rel (0) target = $region21
    $region20: #{midi_block.1} parent=1 // pred_region
      _
    $region21: #{midi_block.1} parent=1 // pred_fallthru
      _
    // Predicated region
    $region22: #{midi_block.1} parent=1 // pred_check
      _
    $region23: #{midi_block.1} parent=1 // pred_check_branch
      %28 = sbr.rel (0) target = $region25
    $region24: #{midi_block.1} parent=1 // pred_region
      _
    $region25: #{midi_block.1} parent=1 // pred_fallthru
      _
    // Predicated region
    $region26: #{midi_block.1} parent=1 // pred_check
      _
    $region27: #{midi_block.1} parent=1 // pred_check_branch
      %30 = sbr.rel (0) target = $region29
    $region28: #{midi_block.1} parent=1 // pred_region
      _
    $region29: #{midi_block.1} parent=1 // pred_fallthru
      _
    // Predicated region
    $region30: #{midi_block.1} parent=1 // pred_check
      _
    $region31: #{midi_block.1} parent=1 // pred_check_branch
      %32 = sbr.rel (0) target = $region33
    $region32: #{midi_block.1} parent=1 // pred_region
      _
    $region33: #{midi_block.1} parent=1 // pred_fallthru
      _
    // Predicated region
    $region34: #{midi_block.1} parent=1 // pred_check
      _
    $region35: #{midi_block.1} parent=1 // pred_check_branch
      %34 = sbr.rel (0) target = $region37
    $region36: #{midi_block.1} parent=1 // pred_region
      _
    $region37: #{midi_block.1} parent=1 // pred_fallthru
      _
    // Predicated region
    $region38: #{midi_block.1} parent=1 // pred_check
      _
    $region39: #{midi_block.1} parent=1 // pred_check_branch
      %36 = sbr.rel (0) target = $region41
    $region40: #{midi_block.1} parent=1 // pred_region
      _
    $region41: #{midi_block.1} parent=1 // pred_fallthru
      _
    // Predicated region
    $region42: #{midi_block.1} parent=1 // pred_check
      _
    $region43: #{midi_block.1} parent=1 // pred_check_branch
      %38 = sbr.rel (0) target = $region45
    $region44: #{midi_block.1} parent=1 // pred_region
      _
    $region45: #{midi_block.1} parent=1 // pred_fallthru
      _
    %v39 = vld [vmem:[%s0] sm:$0xff]
    %v40 = vld [vmem:[%s0 + $0x8] sm:$0xff]
    %v41 = vld [vmem:[%s7] sm:$0xff]
    %v42 = vld [vmem:[%s7 + $0x8] sm:$0x3]
    %v43 = vld [vmem:[%s1] sm:$0xff]
    %v44 = vld [vmem:[%s1 + $0x8] sm:$0xff]
    %v45 = vld [vmem:[%s1 + $0x10] sm:$0xff]
    %v46 = vld [vmem:[%s1 + $0x18] sm:$0xff]
    %v47 = vperm.slane %v41, 0
    %vm48 = vcmask 261120
    %v50 = vsel %vm48, %v39, 0
    %v53 = vsel %vm48, %v40, 0
    %55 = vmatpush.msra.mxu0 0.0
    %56 = vmatpush.msra.mxu0 0.0
    %57 = vmatpush.msra.mxu0 0.0
    %58 = vmatpush.msra.mxu0 0.0
    %59 = vmatpush.msra.mxu0 0.0
    %60 = vmatpush.msra.mxu0 0.0
    %61 = vmatpush.msra.mxu0 0.0
    %62 = vmatpush.msra.mxu0 0.0
    %63 = vmatpush.msra.mxu0 0.0
    %64 = vmatpush.msra.mxu0 0.0
    %65 = vmatpush.msra.mxu0 0.0
    %66 = vmatpush.msra.mxu0 0.0
    %67 = vmatpush.msra.mxu0 %v46
    %68 = vmatpush.msra.mxu0 %v45
    %69 = vmatpush.msra.mxu0 %v44
    %70 = vmatpush.msra.mxu0 %v43
    %71 = vmatmul.f32.gmra.mxu0 %v50
    %v72 = vpop.f32.mrf.mxu0
    %v73 = vadd.f32 %v47, %v72
    %74 = vmatmul.f32.gmra.mxu0 %v53
    %v75 = vpop.f32.mrf.mxu0
    %v76 = vadd.f32 %v47, %v75
    %77 = vdwg.mxu0
    %v78 = vld [vmem:[%s2] sm:$0xff]
    %v79 = vld [vmem:[%s2 + $0x8] sm:$0xff]
    %v80 = vld [vmem:[%s2 + $0x10] sm:$0xff]
    %v81 = vld [vmem:[%s2 + $0x18] sm:$0xff]
    %v82 = vperm.slane %v41, 1
    %83 = vmatpush.msra.mxu0 0.0
    %84 = vmatpush.msra.mxu0 0.0
    %85 = vmatpush.msra.mxu0 0.0
    %86 = vmatpush.msra.mxu0 0.0
    %87 = vmatpush.msra.mxu0 0.0
    %88 = vmatpush.msra.mxu0 0.0
    %89 = vmatpush.msra.mxu0 0.0
    %90 = vmatpush.msra.mxu0 0.0
    %91 = vmatpush.msra.mxu0 0.0
    %92 = vmatpush.msra.mxu0 0.0
    %93 = vmatpush.msra.mxu0 0.0
    %94 = vmatpush.msra.mxu0 0.0
    %95 = vmatpush.msra.mxu0 %v81
    %96 = vmatpush.msra.mxu0 %v80
    %97 = vmatpush.msra.mxu0 %v79
    %98 = vmatpush.msra.mxu0 %v78
    %99 = vmatmul.f32.gmra.mxu0 %v50
    %v100 = vpop.f32.mrf.mxu0
    %v101 = vadd.f32 %v82, %v100
    %102 = vmatmul.f32.gmra.mxu0 %v53
    %v103 = vpop.f32.mrf.mxu0
    %v104 = vadd.f32 %v82, %v103
    %105 = vdwg.mxu0
    %v106 = vld [vmem:[%s3] sm:$0xff]
    %v107 = vld [vmem:[%s3 + $0x8] sm:$0xff]
    %v108 = vld [vmem:[%s3 + $0x10] sm:$0xff]
    %v109 = vld [vmem:[%s3 + $0x18] sm:$0xff]
    %v110 = vperm.slane %v41, 2
    %111 = vmatpush.msra.mxu0 0.0
    %112 = vmatpush.msra.mxu0 0.0
    %113 = vmatpush.msra.mxu0 0.0
    %114 = vmatpush.msra.mxu0 0.0
    %115 = vmatpush.msra.mxu0 0.0
    %116 = vmatpush.msra.mxu0 0.0
    %117 = vmatpush.msra.mxu0 0.0
    %118 = vmatpush.msra.mxu0 0.0
    %119 = vmatpush.msra.mxu0 0.0
    %120 = vmatpush.msra.mxu0 0.0
    %121 = vmatpush.msra.mxu0 0.0
    %122 = vmatpush.msra.mxu0 0.0
    %123 = vmatpush.msra.mxu0 %v109
    %124 = vmatpush.msra.mxu0 %v108
    %125 = vmatpush.msra.mxu0 %v107
    %126 = vmatpush.msra.mxu0 %v106
    %127 = vmatmul.f32.gmra.mxu0 %v50
    %v128 = vpop.f32.mrf.mxu0
    %v129 = vadd.f32 %v110, %v128
    %130 = vmatmul.f32.gmra.mxu0 %v53
    %v131 = vpop.f32.mrf.mxu0
    %v132 = vadd.f32 %v110, %v131
    %133 = vdwg.mxu0
    %v134 = vld [vmem:[%s9] sm:$0xff]
    %v135 = vld [vmem:[%s9 + $0x8] sm:$0xff]
    %v136 = vld [vmem:[%s9 + $0x10] sm:$0xff]
    %v137 = vld [vmem:[%s9 + $0x18] sm:$0xff]
    %v138 = vld [vmem:[%s9 + $0x20] sm:$0xff]
    %v139 = vld [vmem:[%s9 + $0x28] sm:$0xff]
    %v140 = vld [vmem:[%s9 + $0x30] sm:$0xff]
    %v141 = vld [vmem:[%s9 + $0x38] sm:$0xff]
    %v142 = vmul.f32 %v101, %v134
    %v143 = vmul.f32 %v104, %v135
    %v144 = vmul.f32 %v101, %v136
    %v145 = vmul.f32 %v104, %v137
    %v146 = vmul.f32 %v101, %v138
    %v147 = vmul.f32 %v104, %v139
    %v148 = vmul.f32 %v101, %v140
    %v149 = vmul.f32 %v104, %v141
    %v150 = vmul.f32 %v129, %v134
    %v151 = vmul.f32 %v132, %v135
    %v152 = vmul.f32 %v129, %v136
    %v153 = vmul.f32 %v132, %v137
    %v154 = vmul.f32 %v129, %v138
    %v155 = vmul.f32 %v132, %v139
    %v156 = vmul.f32 %v129, %v140
    %v157 = vmul.f32 %v132, %v141
    %v158 = vld [vmem:[%s8] sm:$0xff]
    %v159 = vld [vmem:[%s8 + $0x8] sm:$0xff]
    %v161 = vsel %vm48, %v73, 0
    %v164 = vsel %vm48, %v76, 0
    %v167 = vsel %vm48, %v142, 0
    %v170 = vsel %vm48, %v143, 0
    %v173 = vsel %vm48, %v144, 0
    %v176 = vsel %vm48, %v145, 0
    %v179 = vsel %vm48, %v146, 0
    %v182 = vsel %vm48, %v147, 0
    %v185 = vsel %vm48, %v148, 0
    %v188 = vsel %vm48, %v149, 0
    %190 = vmatpush.xpose.msra.mxu0 0.0
    %191 = vmatpush.xpose.msra.mxu0 0.0
    %192 = vmatpush.xpose.msra.mxu0 0.0
    %193 = vmatpush.xpose.msra.mxu0 0.0
    %194 = vmatpush.xpose.msra.mxu0 0.0
    %195 = vmatpush.xpose.msra.mxu0 0.0
    %196 = vmatpush.xpose.msra.mxu0 0.0
    %197 = vmatpush.xpose.msra.mxu0 0.0
    %198 = vmatpush.xpose.msra.mxu0 %v188
    %199 = vmatpush.xpose.msra.mxu0 %v185
    %200 = vmatpush.xpose.msra.mxu0 %v182
    %201 = vmatpush.xpose.msra.mxu0 %v179
    %202 = vmatpush.xpose.msra.mxu0 %v176
    %203 = vmatpush.xpose.msra.mxu0 %v173
    %204 = vmatpush.xpose.msra.mxu0 %v170
    %205 = vmatpush.xpose.msra.mxu0 %v167
    %206 = vmatmul.f32.gmra.mxu0 %v161
    %v207 = vpop.f32.mrf.mxu0
    %v208 = vadd.f32 %v158, %v207
    %209 = vmatmul.f32.gmra.mxu0 %v164
    %v210 = vpop.f32.mrf.mxu0
    %v211 = vadd.f32 %v159, %v210
    %212 = vdwg.mxu0
    %vm213 = vcmask 523264
    %v214 = vsel %vm213, %v208, -inf
    %215 = vmax.xlane.f32.xlu0 %v214
    %v216 = vpop.xlane.xlu0 %215
    %v217 = vsel %vm213, %v211, -inf
    %218 = vmax.xlane.f32.xlu0 %v217
    %v219 = vpop.xlane.xlu0 %218
    %v220 = vsub.f32 %v208, %v216
    %v221 = vsub.f32 %v211, %v219
    %v222 = vmul.f32 %v220, 1.442695
    %v223 = vpow.pop %v222
    %v224 = vmul.f32 %v221, 1.442695
    %v225 = vpow.pop %v224
    %v226 = vld [vmem:[%s10] sm:$0xff]
    %v227 = vld [vmem:[%s10 + $0x8] sm:$0xff]
    %v228 = vld [vmem:[%s10 + $0x10] sm:$0xff]
    %v229 = vld [vmem:[%s10 + $0x18] sm:$0xff]
    %v230 = vld [vmem:[%s10 + $0x20] sm:$0xff]
    %v231 = vld [vmem:[%s10 + $0x28] sm:$0xff]
    %v232 = vld [vmem:[%s10 + $0x30] sm:$0xff]
    %v233 = vld [vmem:[%s10 + $0x38] sm:$0xff]
    %v235 = vsel %vm213, %v223, 0
    %v238 = vsel %vm213, %v225, 0
    %240 = vmatpush.msra.mxu0 0.0
    %241 = vmatpush.msra.mxu0 0.0
    %242 = vmatpush.msra.mxu0 0.0
    %243 = vmatpush.msra.mxu0 0.0
    %244 = vmatpush.msra.mxu0 0.0
    %245 = vmatpush.msra.mxu0 0.0
    %246 = vmatpush.msra.mxu0 0.0
    %247 = vmatpush.msra.mxu0 0.0
    %248 = vmatpush.msra.mxu0 %v233
    %249 = vmatpush.msra.mxu0 %v232
    %250 = vmatpush.msra.mxu0 %v231
    %251 = vmatpush.msra.mxu0 %v230
    %252 = vmatpush.msra.mxu0 %v229
    %253 = vmatpush.msra.mxu0 %v228
    %254 = vmatpush.msra.mxu0 %v227
    %255 = vmatpush.msra.mxu0 %v226
    %256 = vmatmul.f32.gmra.mxu0 %v235
    %v257 = vpop.f32.mrf.mxu0
    %v258 = vadd.f32 0.0, %v257
    %259 = vmatmul.f32.gmra.mxu0 %v238
    %v260 = vpop.f32.mrf.mxu0
    %v261 = vadd.f32 0.0, %v260
    %262 = vdwg.mxu0
    %v263 = vrcp.pop %v258
    %v264 = vrcp.pop %v261
    %v265 = vmul.f32 %v223, %v263
    %v266 = vmul.f32 %v225, %v264
    %v268 = vsel %vm213, %v265, 0
    %v271 = vsel %vm213, %v266, 0
    %273 = vmatpush.msra.mxu0 0.0
    %274 = vmatpush.msra.mxu0 0.0
    %275 = vmatpush.msra.mxu0 0.0
    %276 = vmatpush.msra.mxu0 0.0
    %277 = vmatpush.msra.mxu0 0.0
    %278 = vmatpush.msra.mxu0 0.0
    %279 = vmatpush.msra.mxu0 0.0
    %280 = vmatpush.msra.mxu0 0.0
    %281 = vmatpush.msra.mxu0 %v157
    %282 = vmatpush.msra.mxu0 %v156
    %283 = vmatpush.msra.mxu0 %v155
    %284 = vmatpush.msra.mxu0 %v154
    %285 = vmatpush.msra.mxu0 %v153
    %286 = vmatpush.msra.mxu0 %v152
    %287 = vmatpush.msra.mxu0 %v151
    %288 = vmatpush.msra.mxu0 %v150
    %289 = vmatmul.f32.gmra.mxu0 %v268
    %v290 = vpop.f32.mrf.mxu0
    %v291 = vadd.f32 0.0, %v290
    %292 = vmatmul.f32.gmra.mxu0 %v271
    %v293 = vpop.f32.mrf.mxu0
    %v294 = vadd.f32 0.0, %v293
    %295 = vdwg.mxu0
    %v296 = vld [vmem:[%s4] sm:$0xff]
    %v297 = vld [vmem:[%s4 + $0x8] sm:$0xff]
    %v298 = vld [vmem:[%s4 + $0x10] sm:$0xff]
    %v299 = vld [vmem:[%s4 + $0x18] sm:$0xff]
    %v300 = vperm.slane %v41, 3
    %v302 = vsel %vm48, %v291, 0
    %v305 = vsel %vm48, %v294, 0
    %307 = vmatpush.msra.mxu0 0.0
    %308 = vmatpush.msra.mxu0 0.0
    %309 = vmatpush.msra.mxu0 0.0
    %310 = vmatpush.msra.mxu0 0.0
    %311 = vmatpush.msra.mxu0 0.0
    %312 = vmatpush.msra.mxu0 0.0
    %313 = vmatpush.msra.mxu0 0.0
    %314 = vmatpush.msra.mxu0 0.0
    %315 = vmatpush.msra.mxu0 0.0
    %316 = vmatpush.msra.mxu0 0.0
    %317 = vmatpush.msra.mxu0 0.0
    %318 = vmatpush.msra.mxu0 0.0
    %319 = vmatpush.msra.mxu0 %v299
    %320 = vmatpush.msra.mxu0 %v298
    %321 = vmatpush.msra.mxu0 %v297
    %322 = vmatpush.msra.mxu0 %v296
    %323 = vmatmul.f32.gmra.mxu0 %v302
    %v324 = vpop.f32.mrf.mxu0
    %v325 = vadd.f32 %v300, %v324
    %326 = vmatmul.f32.gmra.mxu0 %v305
    %v327 = vpop.f32.mrf.mxu0
    %v328 = vadd.f32 %v300, %v327
    %329 = vdwg.mxu0
    %v330 = vadd.f32 %v325, %v39
    %v331 = vadd.f32 %v328, %v40
    %v332 = vsel %vm48, %v330, 0.0
    %333 = vadd.xlane.f32.xlu0 %v332
    %v334 = vpop.xlane.xlu0 %333
    %v335 = vsel %vm48, %v331, 0.0
    %336 = vadd.xlane.f32.xlu0 %v335
    %v337 = vpop.xlane.xlu0 %336
    %v338 = vrcp.pop 32.0
    %v339 = vmul.f32 32.0, %v338
    %v340 = vsub.f32 1.0, %v339
    %v341 = vmul.f32 %v338, %v340
    %v342 = vadd.f32 %v338, %v341
    %vm343 = vweird.f32 %v338
    %v344 = vsel %vm343, %v338, %v342
    %v345 = vmul.f32 %v334, %v344
    %v346 = vmul.f32 %v337, %v344
    %v347 = vsub.f32 %v330, %v345
    %v348 = vsub.f32 %v331, %v346
    %v349 = vmul.f32 %v347, %v347
    %v350 = vmul.f32 %v348, %v348
    %v351 = vsel %vm48, %v349, 0.0
    %352 = vadd.xlane.f32.xlu0 %v351
    %v353 = vpop.xlane.xlu0 %352
    %v354 = vsel %vm48, %v350, 0.0
    %355 = vadd.xlane.f32.xlu0 %v354
    %v356 = vpop.xlane.xlu0 %355
    %v357 = vmul.f32 %v353, %v344
    %v358 = vmul.f32 %v356, %v344
    %v359 = vadd.f32 %v357, 1e-05
    %v360 = vadd.f32 %v358, 1e-05
    %v361 = vrsqrt.pop %v359
    %v362 = vmul.f32 %v361, %v359
    %v363 = vmul.f32 %v362, %v361
    %v364 = vmul.f32 0.5, %v363
    %v365 = vsub.f32 1.5, %v364
    %v366 = vmul.f32 %v361, %v365
    %vm367 = vweird.f32 %v359
    %vm368 = vweird.f32 %v361
    %vm369 = vmor %vm367, %vm368
    %v370 = vsel %vm369, %v361, %v366
    %v371 = vrsqrt.pop %v360
    %v372 = vmul.f32 %v371, %v360
    %v373 = vmul.f32 %v372, %v371
    %v374 = vmul.f32 0.5, %v373
    %v375 = vsub.f32 1.5, %v374
    %v376 = vmul.f32 %v371, %v375
    %vm377 = vweird.f32 %v360
    %vm378 = vweird.f32 %v371
    %vm379 = vmor %vm377, %vm378
    %v380 = vsel %vm379, %v371, %v376
    %v381 = vmul.f32 %v347, %v370
    %v382 = vmul.f32 %v348, %v380
    %v383 = vperm.slane %v41, 6
    %v384 = vmul.f32 %v381, %v383
    %v385 = vmul.f32 %v382, %v383
    %v386 = vperm.slane %v41, 7
    %v387 = vadd.f32 %v384, %v386
    %v388 = vadd.f32 %v385, %v386
    %v389 = vld [vmem:[%s5] sm:$0xff]
    %v390 = vld [vmem:[%s5 + $0x8] sm:$0xff]
    %v391 = vld [vmem:[%s5 + $0x10] sm:$0xff]
    %v392 = vld [vmem:[%s5 + $0x18] sm:$0xff]
    %v393 = vperm.slane %v41, 4
    %v395 = vsel %vm48, %v387, 0
    %v398 = vsel %vm48, %v388, 0
    %400 = vmatpush.msra.mxu0 0.0
    %401 = vmatpush.msra.mxu0 0.0
    %402 = vmatpush.msra.mxu0 0.0
    %403 = vmatpush.msra.mxu0 0.0
    %404 = vmatpush.msra.mxu0 0.0
    %405 = vmatpush.msra.mxu0 0.0
    %406 = vmatpush.msra.mxu0 0.0
    %407 = vmatpush.msra.mxu0 0.0
    %408 = vmatpush.msra.mxu0 0.0
    %409 = vmatpush.msra.mxu0 0.0
    %410 = vmatpush.msra.mxu0 0.0
    %411 = vmatpush.msra.mxu0 0.0
    %412 = vmatpush.msra.mxu0 %v392
    %413 = vmatpush.msra.mxu0 %v391
    %414 = vmatpush.msra.mxu0 %v390
    %415 = vmatpush.msra.mxu0 %v389
    %416 = vmatmul.f32.gmra.mxu0 %v395
    %v417 = vpop.f32.mrf.mxu0
    %v418 = vadd.f32 %v393, %v417
    %419 = vmatmul.f32.gmra.mxu0 %v398
    %v420 = vpop.f32.mrf.mxu0
    %v421 = vadd.f32 %v393, %v420
    %422 = vdwg.mxu0
    %v423 = vmax.f32 %v418, 0.0
    %v424 = vmax.f32 %v421, 0.0
    %v425 = vld [vmem:[%s6] sm:$0xff]
    %v426 = vld [vmem:[%s6 + $0x8] sm:$0xff]
    %v427 = vld [vmem:[%s6 + $0x10] sm:$0xff]
    %v428 = vld [vmem:[%s6 + $0x18] sm:$0xff]
    %v429 = vld [vmem:[%s6 + $0x20] sm:$0xff]
    %v430 = vld [vmem:[%s6 + $0x28] sm:$0xff]
    %v431 = vld [vmem:[%s6 + $0x30] sm:$0xff]
    %v432 = vld [vmem:[%s6 + $0x38] sm:$0xff]
    %v433 = vperm.slane %v41, 5
    %v435 = vsel %vm213, %v423, 0
    %v438 = vsel %vm213, %v424, 0
    %440 = vmatpush.msra.mxu0 0.0
    %441 = vmatpush.msra.mxu0 0.0
    %442 = vmatpush.msra.mxu0 0.0
    %443 = vmatpush.msra.mxu0 0.0
    %444 = vmatpush.msra.mxu0 0.0
    %445 = vmatpush.msra.mxu0 0.0
    %446 = vmatpush.msra.mxu0 0.0
    %447 = vmatpush.msra.mxu0 0.0
    %448 = vmatpush.msra.mxu0 %v432
    %449 = vmatpush.msra.mxu0 %v431
    %450 = vmatpush.msra.mxu0 %v430
    %451 = vmatpush.msra.mxu0 %v429
    %452 = vmatpush.msra.mxu0 %v428
    %453 = vmatpush.msra.mxu0 %v427
    %454 = vmatpush.msra.mxu0 %v426
    %455 = vmatpush.msra.mxu0 %v425
    %456 = vmatmul.f32.gmra.mxu0 %v435
    %v457 = vpop.f32.mrf.mxu0
    %v458 = vadd.f32 %v433, %v457
    %459 = vmatmul.f32.gmra.mxu0 %v438
    %v460 = vpop.f32.mrf.mxu0
    %v461 = vadd.f32 %v433, %v460
    %462 = vdwg.mxu0
    %v463 = vadd.f32 %v458, %v387
    %v464 = vadd.f32 %v461, %v388
    %v465 = vsel %vm48, %v463, 0.0
    %466 = vadd.xlane.f32.xlu0 %v465
    %v467 = vpop.xlane.xlu0 %466
    %v468 = vsel %vm48, %v464, 0.0
    %469 = vadd.xlane.f32.xlu0 %v468
    %v470 = vpop.xlane.xlu0 %469
    %v471 = vmul.f32 %v467, %v344
    %v472 = vmul.f32 %v470, %v344
    %v473 = vsub.f32 %v463, %v471
    %v474 = vsub.f32 %v464, %v472
    %v475 = vmul.f32 %v473, %v473
    %v476 = vmul.f32 %v474, %v474
    %v477 = vsel %vm48, %v475, 0.0
    %478 = vadd.xlane.f32.xlu0 %v477
    %v479 = vpop.xlane.xlu0 %478
    %v480 = vsel %vm48, %v476, 0.0
    %481 = vadd.xlane.f32.xlu0 %v480
    %v482 = vpop.xlane.xlu0 %481
    %v483 = vmul.f32 %v479, %v344
    %v484 = vmul.f32 %v482, %v344
    %v485 = vadd.f32 %v483, 1e-05
    %v486 = vadd.f32 %v484, 1e-05
    %v487 = vrsqrt.pop %v485
    %v488 = vmul.f32 %v487, %v485
    %v489 = vmul.f32 %v488, %v487
    %v490 = vmul.f32 0.5, %v489
    %v491 = vsub.f32 1.5, %v490
    %v492 = vmul.f32 %v487, %v491
    %vm493 = vweird.f32 %v485
    %vm494 = vweird.f32 %v487
    %vm495 = vmor %vm493, %vm494
    %v496 = vsel %vm495, %v487, %v492
    %v497 = vrsqrt.pop %v486
    %v498 = vmul.f32 %v497, %v486
    %v499 = vmul.f32 %v498, %v497
    %v500 = vmul.f32 0.5, %v499
    %v501 = vsub.f32 1.5, %v500
    %v502 = vmul.f32 %v497, %v501
    %vm503 = vweird.f32 %v486
    %vm504 = vweird.f32 %v497
    %vm505 = vmor %vm503, %vm504
    %v506 = vsel %vm505, %v497, %v502
    %v507 = vmul.f32 %v473, %v496
    %v508 = vmul.f32 %v474, %v506
    %v509 = vperm.slane %v42, 0
    %v510 = vmul.f32 %v507, %v509
    %v511 = vmul.f32 %v508, %v509
    %v512 = vperm.slane %v42, 1
    %v513 = vadd.f32 %v510, %v512
    %v514 = vadd.f32 %v511, %v512
    %515 = vst.msk [vmem:[#allocation2] sm:$0xff] %vm48, %v513
    %516 = vst.msk [vmem:[#allocation2 + $0x8] sm:$0xff] %vm48, %v514
    // Predicated region
    $region46: #{midi_block.1} parent=1 // pred_check
      _
    $region47: #{midi_block.1} parent=1 // pred_check_branch
      %518 = sbr.rel (0) target = $region49
    $region48: #{midi_block.1} parent=1 // pred_region
      %520 = vsyncadd [#allocation3], 0
      %s521 = sshll.u32 [#allocation2], 4
      %s522 = int_to_ptr.vmem [resolvable:$true] %s521
      %s523 = sshll.u32 %s11, 4
      %s524 = int_to_ptr.hbm [resolvable:$true] %s523
      %529 = dma.vmem_to_hbm [thread:$0]  %s522, 256, %s524, [#allocation3], 128, 128, 8
    $region49: #{midi_block.1} parent=1 // pred_fallthru
      _
    // Predicated region
    $region50: #{midi_block.1} parent=1 // pred_check
      _
    $region51: #{midi_block.1} parent=1 // pred_check_branch
      %531 = sbr.rel (0) target = $region53
    $region52: #{midi_block.1} parent=1 // pred_region
      %533 = dma.done [#allocation3], 256
    $region53: #{midi_block.1} parent=1 // pred_fallthru
      _
    %534 = vsyncpa [#allocation3], 1

</llo_original>
